<compile_context>
chip_gen: v5e
topology: v5e:2x2
jax: 0.10.0
libtpu: 0.0.40
codegen_flags: <defaults>
</compile_context>

<pallas_src>
import functools

import jax
import jax.numpy as jnp
from jax.experimental import pallas as pl
from jax.experimental.pallas import tpu as pltpu

_LANE = 128
_SUBLANE = 8


def _round_up(n, m):
    return ((n + m - 1) // m) * m


def _pad_to(arr, shape):
    pads = [(0, t - s) for s, t in zip(arr.shape, shape)]
    return jnp.pad(arr, pads)


def _mlp_kernel(num_hidden, *refs):
    # refs = (x, w1, b1, [wh_i, bh_i]*num_hidden, w2, b2, out)
    x_ref = refs[0]
    w1_ref, b1_ref = refs[1], refs[2]
    hidden_refs = refs[3:3 + 2 * num_hidden]
    w2_ref, b2_ref = refs[3 + 2 * num_hidden], refs[4 + 2 * num_hidden]
    o_ref = refs[5 + 2 * num_hidden]

    # fc1 + ReLU.  bf16 operands, f32 accumulation on the MXU.
    h = jnp.dot(x_ref[...].astype(jnp.bfloat16), w1_ref[...],
                preferred_element_type=jnp.float32)
    h = jnp.maximum(h + b1_ref[...], 0.0)

    # Hidden layers + ReLU (dropout == 0.0 -> identity).
    for i in range(num_hidden):
        w_ref = hidden_refs[2 * i]
        b_ref = hidden_refs[2 * i + 1]
        h = jnp.dot(h.astype(jnp.bfloat16), w_ref[...],
                    preferred_element_type=jnp.float32)
        h = jnp.maximum(h + b_ref[...], 0.0)

    # fc2 (no activation).  Output block is [tb, out_dim] (unpadded lanes).
    out = jnp.dot(h.astype(jnp.bfloat16), w2_ref[...],
                  preferred_element_type=jnp.float32)
    o_ref[...] = (out + b2_ref[...]).astype(o_ref.dtype)


def prepare_params(params, *, compute_dtype=jnp.bfloat16):
    """One-time prep: pad hidden dim to 128 lanes, cast weights to bf16.

    params: dict with w1[in,hid], b1[1,hid], wh/bh lists, w2[hid,out], b2[1,out]
    (weights already in [in, out] layout).
    """
    in_dim, hidden_dim = params["w1"].shape
    out_dim = params["w2"].shape[1]
    hid_p = _round_up(hidden_dim, _LANE)
    return {
        "w1": _pad_to(params["w1"], (in_dim, hid_p)).astype(compute_dtype),
        "b1": _pad_to(params["b1"], (1, hid_p)).astype(jnp.float32),
        "wh": [_pad_to(w, (hid_p, hid_p)).astype(compute_dtype) for w in params["wh"]],
        "bh": [_pad_to(b, (1, hid_p)).astype(jnp.float32) for b in params["bh"]],
        "w2": _pad_to(params["w2"], (hid_p, out_dim)).astype(compute_dtype),
        "b2": params["b2"].astype(jnp.float32),
        "in_dim": in_dim,
        "out_dim": out_dim,
        "hid_p": hid_p,
        "num_hidden": len(params["wh"]),
    }


def _xla_forward(x, prep):
    """Plain-XLA fallback (same bf16-weight numerics as the kernel)."""
    h = jnp.dot(x.astype(jnp.bfloat16), prep["w1"],
                preferred_element_type=jnp.float32) + prep["b1"]
    h = jnp.maximum(h, 0.0)
    for w, b in zip(prep["wh"], prep["bh"]):
        h = jnp.maximum(jnp.dot(h.astype(jnp.bfloat16), w,
                                preferred_element_type=jnp.float32) + b, 0.0)
    out = jnp.dot(h.astype(jnp.bfloat16), prep["w2"],
                  preferred_element_type=jnp.float32) + prep["b2"]
    return out[:, :prep["out_dim"]]


def betting_strategy_forward(x, prep, *, block_batch=1024, min_pallas_batch=512,
                             force_pallas=False):
    """Forward pass.  x: [batch, in_dim] f32.  prep: output of prepare_params."""
    batch, in_dim = x.shape
    assert in_dim == prep["in_dim"], (in_dim, prep["in_dim"])

    # Tiny batches: the Pallas launch + padding overhead dominates; plain XLA
    # matches or beats the kernel there.
    if (not force_pallas) and batch < min_pallas_batch:
        return _xla_forward(x, prep)

    out_dim = prep["out_dim"]
    hid_p = prep["hid_p"]
    num_hidden = prep["num_hidden"]

    # Batch tile: multiple of 8 sublanes, <= block_batch.
    tb = min(block_batch, _round_up(batch, _SUBLANE))
    tb = _round_up(tb, _SUBLANE)
    batch_p = _round_up(batch, tb)
    grid = (batch_p // tb,)

    x_p = x.astype(jnp.float32)
    if batch_p != batch:
        x_p = jnp.pad(x_p, ((0, batch_p - batch), (0, 0)))

    args = [x_p, prep["w1"], prep["b1"]]
    for w, b in zip(prep["wh"], prep["bh"]):
        args += [w, b]
    args += [prep["w2"], prep["b2"]]

    # x / out tiled on batch (last block dim equals full array dim -> legal,
    # no lane padding needed); weights & biases VMEM-resident via constant
    # index_maps across grid steps.
    in_specs = [pl.BlockSpec((tb, in_dim), lambda i: (i, 0)),
                pl.BlockSpec((in_dim, hid_p), lambda i: (0, 0)),
                pl.BlockSpec((1, hid_p), lambda i: (0, 0))]
    for _ in range(num_hidden):
        in_specs.append(pl.BlockSpec((hid_p, hid_p), lambda i: (0, 0)))
        in_specs.append(pl.BlockSpec((1, hid_p), lambda i: (0, 0)))
    in_specs.append(pl.BlockSpec((hid_p, out_dim), lambda i: (0, 0)))
    in_specs.append(pl.BlockSpec((1, out_dim), lambda i: (0, 0)))

    out_specs = pl.BlockSpec((tb, out_dim), lambda i: (i, 0))

    flops = 2 * batch_p * (in_dim * hid_p + num_hidden * hid_p * hid_p
                           + hid_p * out_dim)
    weight_bytes = sum(int(a.size) * a.dtype.itemsize for a in args[1:])
    bytes_accessed = int(x_p.size) * 4 + weight_bytes + batch_p * out_dim * 4
    cost = pl.CostEstimate(flops=flops, transcendentals=0,
                           bytes_accessed=int(bytes_accessed))

    kernel = functools.partial(_mlp_kernel, num_hidden)

    out = pl.pallas_call(
        kernel,
        out_shape=jax.ShapeDtypeStruct((batch_p, out_dim), jnp.float32),
        grid=grid,
        in_specs=in_specs,
        out_specs=out_specs,
        compiler_params=pltpu.CompilerParams(
            dimension_semantics=("parallel",),
        ),
        cost_estimate=cost,
    )(*args)

    return out[:batch] if batch_p != batch else out


def init_params(key, input_dim, hidden_dim, num_layers, out_dim=3):
    """Deterministic synthetic init; weights stored as [in, out]."""
    num_hidden = num_layers - 1
    keys = jax.random.split(key, 2 * (num_hidden + 2))
    ki = iter(range(len(keys)))

    def lin(k_w, k_b, d_in, d_out):
        w = jax.random.normal(k_w, (d_in, d_out), jnp.float32) * 0.1
        b = jax.random.normal(k_b, (1, d_out), jnp.float32) * 0.1
        return w, b

    w1, b1 = lin(keys[next(ki)], keys[next(ki)], input_dim, hidden_dim)
    wh, bh = [], []
    for _ in range(num_hidden):
        w, b = lin(keys[next(ki)], keys[next(ki)], hidden_dim, hidden_dim)
        wh.append(w)
        bh.append(b)
    w2, b2 = lin(keys[next(ki)], keys[next(ki)], hidden_dim, out_dim)
    return {"w1": w1, "b1": b1, "wh": wh, "bh": bh, "w2": w2, "b2": b2}


def reference_forward(x, params):
    """f32 reference matching the PyTorch module exactly."""
    h = jnp.maximum(x @ params["w1"] + params["b1"], 0.0)
    for w, b in zip(params["wh"], params["bh"]):
        h = jnp.maximum(h @ w + b, 0.0)
    return h @ params["w2"] + params["b2"]


if __name__ == "__main__":
    key = jax.random.PRNGKey(0)
    k_x, k_x2, k_p = jax.random.split(key, 3)

    input_dim = 3
    hidden_dim = 32
    num_layers = 3  # -> 2 hidden layers after fc1

    params = init_params(k_p, input_dim, hidden_dim, num_layers)
    prep = prepare_params(params)

    # Test 1: small batch, force the Pallas kernel path (single grid step).
    batch = 8
    x = jax.random.normal(k_x, (batch, input_dim), jnp.float32)
    out = jax.block_until_ready(
        betting_strategy_forward(x, prep, force_pallas=True))
    ref = reference_forward(x, params)
    assert out.shape == (batch, 3), out.shape
    # bf16 matmul operands vs f32 reference -> loose tolerance.
    assert jnp.allclose(out, ref, atol=5e-2, rtol=5e-2), "mismatch (small batch)"

    # Test 2: multi-tile grid with batch padding (2056 rows, tb=1024 -> 3 steps).
    batch2 = 2056
    x2 = jax.random.normal(k_x2, (batch2, input_dim), jnp.float32)
    out2 = jax.block_until_ready(betting_strategy_forward(x2, prep))
    ref2 = reference_forward(x2, params)
    assert out2.shape == (batch2, 3), out2.shape
    assert jnp.allclose(out2, ref2, atol=5e-2, rtol=5e-2), "mismatch (large batch)"

    print("KERNEL_OK")
</pallas_src>

<mosaic_0001>
module attributes {stable_mosaic.version = 11 : i64} {
  func.func @_mlp_kernel(%arg0: i32, %arg1: memref<8x3xf32, #tpu.memory_space<vmem>>, %arg2: memref<3x128xbf16, #tpu.memory_space<vmem>>, %arg3: memref<1x128xf32, #tpu.memory_space<vmem>>, %arg4: memref<128x128xbf16, #tpu.memory_space<vmem>>, %arg5: memref<1x128xf32, #tpu.memory_space<vmem>>, %arg6: memref<128x128xbf16, #tpu.memory_space<vmem>>, %arg7: memref<1x128xf32, #tpu.memory_space<vmem>>, %arg8: memref<128x3xbf16, #tpu.memory_space<vmem>>, %arg9: memref<1x3xf32, #tpu.memory_space<vmem>>, %arg10: memref<8x3xf32, #tpu.memory_space<vmem>>) attributes {dimension_semantics = [#tpu.dimension_semantics<parallel>], iteration_bounds = array<i64: 1>, scalar_prefetch = 0 : i64, scratch_operands = 0 : i64, tpu.core_type = #tpu.core_type<tc>, window_params = [{transform_indices = @transform_0, window_bounds = array<i64: 8, 3>}, {pipeline_mode = #tpu.pipeline_mode<synchronous>, transform_indices = @transform_1, window_bounds = array<i64: 3, 128>}, {pipeline_mode = #tpu.pipeline_mode<synchronous>, transform_indices = @transform_2, window_bounds = array<i64: 1, 128>}, {pipeline_mode = #tpu.pipeline_mode<synchronous>, transform_indices = @transform_3, window_bounds = array<i64: 128, 128>}, {pipeline_mode = #tpu.pipeline_mode<synchronous>, transform_indices = @transform_4, window_bounds = array<i64: 1, 128>}, {pipeline_mode = #tpu.pipeline_mode<synchronous>, transform_indices = @transform_5, window_bounds = array<i64: 128, 128>}, {pipeline_mode = #tpu.pipeline_mode<synchronous>, transform_indices = @transform_6, window_bounds = array<i64: 1, 128>}, {pipeline_mode = #tpu.pipeline_mode<synchronous>, transform_indices = @transform_7, window_bounds = array<i64: 128, 3>}, {pipeline_mode = #tpu.pipeline_mode<synchronous>, transform_indices = @transform_8, window_bounds = array<i64: 1, 3>}, {transform_indices = @transform_9, window_bounds = array<i64: 8, 3>}]} {
    %c0 = arith.constant 0 : index
    %c0_0 = arith.constant 0 : index
    %0 = vector.load %arg1[%c0, %c0_0] : memref<8x3xf32, #tpu.memory_space<vmem>>, vector<8x3xf32>
    %1 = arith.truncf %0 : vector<8x3xf32> to vector<8x3xbf16>
    %c0_1 = arith.constant 0 : index
    %c0_2 = arith.constant 0 : index
    %2 = vector.load %arg2[%c0_1, %c0_2] : memref<3x128xbf16, #tpu.memory_space<vmem>>, vector<3x128xbf16>
    %cst = arith.constant dense<0.000000e+00> : vector<8x128xf32>
    %3 = tpu.matmul %1, %2, %cst {dimension_numbers = #tpu.dot_dimension_numbers<[1], [0], [0], [1], [0, 0, 1, 1], [], []>} : vector<8x3xbf16>, vector<3x128xbf16>, vector<8x128xf32> -> vector<8x128xf32>
    %c0_3 = arith.constant 0 : index
    %c0_4 = arith.constant 0 : index
    %4 = vector.load %arg3[%c0_3, %c0_4] : memref<1x128xf32, #tpu.memory_space<vmem>>, vector<1x128xf32>
    %5 = vector.broadcast %4 : vector<1x128xf32> to vector<8x128xf32>
    %6 = arith.addf %3, %5 : vector<8x128xf32>
    %cst_5 = arith.constant 0.000000e+00 : f32
    %7 = vector.broadcast %cst_5 : f32 to vector<8x128xf32>
    %8 = arith.maximumf %6, %7 : vector<8x128xf32>
    %9 = arith.truncf %8 : vector<8x128xf32> to vector<8x128xbf16>
    %c0_6 = arith.constant 0 : index
    %c0_7 = arith.constant 0 : index
    %10 = vector.load %arg4[%c0_6, %c0_7] : memref<128x128xbf16, #tpu.memory_space<vmem>>, vector<128x128xbf16>
    %cst_8 = arith.constant dense<0.000000e+00> : vector<8x128xf32>
    %11 = tpu.matmul %9, %10, %cst_8 {dimension_numbers = #tpu.dot_dimension_numbers<[1], [0], [0], [1], [0, 0, 1, 1], [], []>} : vector<8x128xbf16>, vector<128x128xbf16>, vector<8x128xf32> -> vector<8x128xf32>
    %c0_9 = arith.constant 0 : index
    %c0_10 = arith.constant 0 : index
    %12 = vector.load %arg5[%c0_9, %c0_10] : memref<1x128xf32, #tpu.memory_space<vmem>>, vector<1x128xf32>
    %13 = vector.broadcast %12 : vector<1x128xf32> to vector<8x128xf32>
    %14 = arith.addf %11, %13 : vector<8x128xf32>
    %cst_11 = arith.constant 0.000000e+00 : f32
    %15 = vector.broadcast %cst_11 : f32 to vector<8x128xf32>
    %16 = arith.maximumf %14, %15 : vector<8x128xf32>
    %17 = arith.truncf %16 : vector<8x128xf32> to vector<8x128xbf16>
    %c0_12 = arith.constant 0 : index
    %c0_13 = arith.constant 0 : index
    %18 = vector.load %arg6[%c0_12, %c0_13] : memref<128x128xbf16, #tpu.memory_space<vmem>>, vector<128x128xbf16>
    %cst_14 = arith.constant dense<0.000000e+00> : vector<8x128xf32>
    %19 = tpu.matmul %17, %18, %cst_14 {dimension_numbers = #tpu.dot_dimension_numbers<[1], [0], [0], [1], [0, 0, 1, 1], [], []>} : vector<8x128xbf16>, vector<128x128xbf16>, vector<8x128xf32> -> vector<8x128xf32>
    %c0_15 = arith.constant 0 : index
    %c0_16 = arith.constant 0 : index
    %20 = vector.load %arg7[%c0_15, %c0_16] : memref<1x128xf32, #tpu.memory_space<vmem>>, vector<1x128xf32>
    %21 = vector.broadcast %20 : vector<1x128xf32> to vector<8x128xf32>
    %22 = arith.addf %19, %21 : vector<8x128xf32>
    %cst_17 = arith.constant 0.000000e+00 : f32
    %23 = vector.broadcast %cst_17 : f32 to vector<8x128xf32>
    %24 = arith.maximumf %22, %23 : vector<8x128xf32>
    %25 = arith.truncf %24 : vector<8x128xf32> to vector<8x128xbf16>
    %c0_18 = arith.constant 0 : index
    %c0_19 = arith.constant 0 : index
    %26 = vector.load %arg8[%c0_18, %c0_19] : memref<128x3xbf16, #tpu.memory_space<vmem>>, vector<128x3xbf16>
    %cst_20 = arith.constant dense<0.000000e+00> : vector<8x3xf32>
    %27 = tpu.matmul %25, %26, %cst_20 {dimension_numbers = #tpu.dot_dimension_numbers<[1], [0], [0], [1], [0, 0, 1, 1], [], []>} : vector<8x128xbf16>, vector<128x3xbf16>, vector<8x3xf32> -> vector<8x3xf32>
    %c0_21 = arith.constant 0 : index
    %c0_22 = arith.constant 0 : index
    %28 = vector.load %arg9[%c0_21, %c0_22] : memref<1x3xf32, #tpu.memory_space<vmem>>, vector<1x3xf32>
    %29 = vector.broadcast %28 : vector<1x3xf32> to vector<8x3xf32>
    %30 = arith.addf %27, %29 : vector<8x3xf32>
    %c0_23 = arith.constant 0 : index
    %c0_24 = arith.constant 0 : index
    %31 = vector.load %arg10[%c0_23, %c0_24] : memref<8x3xf32, #tpu.memory_space<vmem>>, vector<8x3xf32>
    tpu.vector_store %arg10[%c0_23, %c0_24], %30 {strides = array<i32>} : memref<8x3xf32, #tpu.memory_space<vmem>>, vector<8x3xf32>,
    return
  }
  func.func @transform_0(%arg0: i32) -> (i32, i32) {
    %c0_i32 = arith.constant 0 : i32
    %c0_i32_0 = arith.constant 0 : i32
    return %arg0, %c0_i32 : i32, i32
  }
  func.func @transform_1(%arg0: i32) -> (i32, i32) {
    %c0_i32 = arith.constant 0 : i32
    %c0_i32_0 = arith.constant 0 : i32
    %c0_i32_1 = arith.constant 0 : i32
    return %c0_i32, %c0_i32_0 : i32, i32
  }
  func.func @transform_2(%arg0: i32) -> (i32, i32) {
    %c0_i32 = arith.constant 0 : i32
    %c0_i32_0 = arith.constant 0 : i32
    %c0_i32_1 = arith.constant 0 : i32
    return %c0_i32, %c0_i32_0 : i32, i32
  }
  func.func @transform_3(%arg0: i32) -> (i32, i32) {
    %c0_i32 = arith.constant 0 : i32
    %c0_i32_0 = arith.constant 0 : i32
    %c0_i32_1 = arith.constant 0 : i32
    return %c0_i32, %c0_i32_0 : i32, i32
  }
  func.func @transform_4(%arg0: i32) -> (i32, i32) {
    %c0_i32 = arith.constant 0 : i32
    %c0_i32_0 = arith.constant 0 : i32
    %c0_i32_1 = arith.constant 0 : i32
    return %c0_i32, %c0_i32_0 : i32, i32
  }
  func.func @transform_5(%arg0: i32) -> (i32, i32) {
    %c0_i32 = arith.constant 0 : i32
    %c0_i32_0 = arith.constant 0 : i32
    %c0_i32_1 = arith.constant 0 : i32
    return %c0_i32, %c0_i32_0 : i32, i32
  }
  func.func @transform_6(%arg0: i32) -> (i32, i32) {
    %c0_i32 = arith.constant 0 : i32
    %c0_i32_0 = arith.constant 0 : i32
    %c0_i32_1 = arith.constant 0 : i32
    return %c0_i32, %c0_i32_0 : i32, i32
  }
  func.func @transform_7(%arg0: i32) -> (i32, i32) {
    %c0_i32 = arith.constant 0 : i32
    %c0_i32_0 = arith.constant 0 : i32
    %c0_i32_1 = arith.constant 0 : i32
    return %c0_i32, %c0_i32_0 : i32, i32
  }
  func.func @transform_8(%arg0: i32) -> (i32, i32) {
    %c0_i32 = arith.constant 0 : i32
    %c0_i32_0 = arith.constant 0 : i32
    %c0_i32_1 = arith.constant 0 : i32
    return %c0_i32, %c0_i32_0 : i32, i32
  }
  func.func @transform_9(%arg0: i32) -> (i32, i32) {
    %c0_i32 = arith.constant 0 : i32
    %c0_i32_0 = arith.constant 0 : i32
    return %arg0, %c0_i32 : i32, i32
  }
}

</mosaic_0001>

<llo_original>
// kernel: tpu_custom_call.1
$region0: #{tpu_custom_call.1}
  #allocation0 [shape = 'u32[]', space=smem, size = 0x4, offset = 0x4, fixed_abs, tag = 'smem constant byte address 0x4 - core index']
  #allocation1 [shape = 'u32[72,128]{1,0:T(1,128)}', space=vmem, size = 0x9000, scoped, tag = 'internal scratch']
  %s0 = inlined_call_operand.vmem [shape: f32[8,3], index: 0, kind: input, shape index: {}]
  %s1 = inlined_call_operand.vmem [shape: bf16[3,128], index: 1, kind: input, shape index: {}]
  %s2 = inlined_call_operand.vmem [shape: f32[1,128], index: 2, kind: input, shape index: {}]
  %s3 = inlined_call_operand.vmem [shape: bf16[128,128], index: 3, kind: input, shape index: {}]
  %s4 = inlined_call_operand.vmem [shape: f32[1,128], index: 4, kind: input, shape index: {}]
  %s5 = inlined_call_operand.hbm [shape: bf16[128,128], index: 5, kind: input, shape index: {}]
  %s6 = inlined_call_operand.vmem [shape: f32[1,128], index: 6, kind: input, shape index: {}]
  %s7 = inlined_call_operand.vmem [shape: bf16[128,3], index: 7, kind: input, shape index: {}]
  %s8 = inlined_call_operand.vmem [shape: f32[1,3], index: 8, kind: input, shape index: {}]
  %s9 = inlined_call_operand.vmem [shape: f32[8,3], index: 9, kind: output, shape index: {}]
  %s10 = sld [smem:[#allocation0]]
  $region50: #{tpu_custom_call.1} parent=0
    _
  %s12 = ssub.s32 1, %s10
  %s13 = scalar_select 0, %s12, %s10
  $region1: #{tpu_custom_call.1} parent=0
    #allocation2 [shape = 'u8[32768]{0}', space=vmem, size = 0x8000, scoped, tag = 'input window, operand 5, single buffered']
    #allocation3 [shape = 's32[1]{0}', space=sflag, size = 0x4, scoped, tag = 'scoped memory for tpu_custom_call.1']
    %14 = vsyncpa [#allocation3], 0
    // Predicated region
    $region2: #{tpu_custom_call.1} parent=1 // pred_check
      _
    $region3: #{tpu_custom_call.1} parent=1 // pred_check_branch
      %16 = sbr.rel (0) target = $region5
    $region4: #{tpu_custom_call.1} parent=1 // pred_region
      _
    $region5: #{tpu_custom_call.1} parent=1 // pred_fallthru
      _
    // Predicated region
    $region6: #{tpu_custom_call.1} parent=1 // pred_check
      _
    $region7: #{tpu_custom_call.1} parent=1 // pred_check_branch
      %18 = sbr.rel (0) target = $region9
    $region8: #{tpu_custom_call.1} parent=1 // pred_region
      _
    $region9: #{tpu_custom_call.1} parent=1 // pred_fallthru
      _
    // Predicated region
    $region10: #{tpu_custom_call.1} parent=1 // pred_check
      _
    $region11: #{tpu_custom_call.1} parent=1 // pred_check_branch
      %20 = sbr.rel (0) target = $region13
    $region12: #{tpu_custom_call.1} parent=1 // pred_region
      _
    $region13: #{tpu_custom_call.1} parent=1 // pred_fallthru
      _
    // Predicated region
    $region14: #{tpu_custom_call.1} parent=1 // pred_check
      _
    $region15: #{tpu_custom_call.1} parent=1 // pred_check_branch
      %22 = sbr.rel (0) target = $region17
    $region16: #{tpu_custom_call.1} parent=1 // pred_region
      _
    $region17: #{tpu_custom_call.1} parent=1 // pred_fallthru
      _
    // Predicated region
    $region18: #{tpu_custom_call.1} parent=1 // pred_check
      _
    $region19: #{tpu_custom_call.1} parent=1 // pred_check_branch
      %24 = sbr.rel (0) target = $region21
    $region20: #{tpu_custom_call.1} parent=1 // pred_region
      _
    $region21: #{tpu_custom_call.1} parent=1 // pred_fallthru
      _
    // Predicated region
    $region22: #{tpu_custom_call.1} parent=1 // pred_check
      _
    $region23: #{tpu_custom_call.1} parent=1 // pred_check_branch
      %26 = sbr.rel (0) target = $region25
    $region24: #{tpu_custom_call.1} parent=1 // pred_region
      %28 = vsyncadd [#allocation3], 0
      %s29 = sshll.u32 %s5, 4
      %s30 = int_to_ptr.hbm [resolvable:$true] %s29
      %s31 = sshll.u32 [#allocation2], 4
      %s32 = int_to_ptr.vmem [resolvable:$true] %s31
      %37 = dma.hbm_to_vmem [thread:$0]  %s30, 1024, %s32, [#allocation3], 64, 64, 4
    $region25: #{tpu_custom_call.1} parent=1 // pred_fallthru
      _
    // Predicated region
    $region26: #{tpu_custom_call.1} parent=1 // pred_check
      _
    $region27: #{tpu_custom_call.1} parent=1 // pred_check_branch
      %39 = sbr.rel (0) target = $region29
    $region28: #{tpu_custom_call.1} parent=1 // pred_region
      _
    $region29: #{tpu_custom_call.1} parent=1 // pred_fallthru
      _
    // Predicated region
    $region30: #{tpu_custom_call.1} parent=1 // pred_check
      _
    $region31: #{tpu_custom_call.1} parent=1 // pred_check_branch
      %41 = sbr.rel (0) target = $region33
    $region32: #{tpu_custom_call.1} parent=1 // pred_region
      _
    $region33: #{tpu_custom_call.1} parent=1 // pred_fallthru
      _
    // Predicated region
    $region34: #{tpu_custom_call.1} parent=1 // pred_check
      _
    $region35: #{tpu_custom_call.1} parent=1 // pred_check_branch
      %43 = sbr.rel (0) target = $region37
    $region36: #{tpu_custom_call.1} parent=1 // pred_region
      _
    $region37: #{tpu_custom_call.1} parent=1 // pred_fallthru
      _
    // Predicated region
    $region38: #{tpu_custom_call.1} parent=1 // pred_check
      _
    $region39: #{tpu_custom_call.1} parent=1 // pred_check_branch
      %45 = sbr.rel (0) target = $region41
    $region40: #{tpu_custom_call.1} parent=1 // pred_region
      %47 = dma.done [#allocation3], 1024
    $region41: #{tpu_custom_call.1} parent=1 // pred_fallthru
      _
    %v49 = vld [vmem:[%s0] sm:$0xff]
    %v50 = vpack.c.bf16 %v49, %v49
    %v51 = vld [vmem:[%s1] sm:$0x3]
    %v52 = vld [vmem:[%s2] sm:$0x1]
    %v54 = vperm.slane %v52, 0
    %vm56 = vcmask 23552
    %v58 = vsel %vm56, %v50, 0
    %vm60 = vcmask 1040384
    %vm61 = vcmask 1041408
    %v62 = vsel %vm60, 4294967295, 65535
    %v63 = vsel %vm61, %v62, 0
    %v65 = vand.u32 %v51, %v63
    %67 = vmatpush.bf16.msra.mxu0 0
    %68 = vmatpush.bf16.msra.mxu0 0
    %69 = vmatpush.bf16.msra.mxu0 0
    %70 = vmatpush.bf16.msra.mxu0 0
    %71 = vmatpush.bf16.msra.mxu0 0
    %72 = vmatpush.bf16.msra.mxu0 0
    %73 = vmatpush.bf16.msra.mxu0 0
    %74 = vmatpush.bf16.msra.mxu0 %v65
    %75 = vmatmul.bf16.gmra.mxu0 %v58
    %v76 = vpop.f32.mrf.mxu0
    %v77 = vadd.f32 %v54, %v76
    %v78 = vpop.f32.mrf.mxu0
    %79 = vdwg.mxu0
    %v80 = vmax.f32 %v77, 0.0
    %v81 = vpack.c.bf16 %v80, %v80
    %v82 = vld [vmem:[%s3] sm:$0xf]
    %v83 = vld [vmem:[%s3 + $0x4] sm:$0xf]
    %v84 = vld [vmem:[%s3 + $0x8] sm:$0xf]
    %v85 = vld [vmem:[%s3 + $0xc] sm:$0xf]
    %v86 = vld [vmem:[%s3 + $0x10] sm:$0xf]
    %v87 = vld [vmem:[%s3 + $0x14] sm:$0xf]
    %v88 = vld [vmem:[%s3 + $0x18] sm:$0xf]
    %v89 = vld [vmem:[%s3 + $0x1c] sm:$0xf]
    %v90 = vld [vmem:[%s3 + $0x20] sm:$0xf]
    %v91 = vld [vmem:[%s3 + $0x24] sm:$0xf]
    %v92 = vld [vmem:[%s3 + $0x28] sm:$0xf]
    %v93 = vld [vmem:[%s3 + $0x2c] sm:$0xf]
    %v94 = vld [vmem:[%s3 + $0x30] sm:$0xf]
    %v95 = vld [vmem:[%s3 + $0x34] sm:$0xf]
    %v96 = vld [vmem:[%s3 + $0x38] sm:$0xf]
    %v97 = vld [vmem:[%s3 + $0x3c] sm:$0xf]
    %v98 = vld [vmem:[%s4] sm:$0x1]
    %v100 = vperm.slane %v98, 0
    %v118 = vunpack.c.l.b16 %v82
    %v119 = vunpack.c.l.b16 %v83
    %v120 = vunpack.c.l.b16 %v84
    %v121 = vunpack.c.l.b16 %v85
    %v122 = vunpack.c.l.b16 %v86
    %v123 = vunpack.c.l.b16 %v87
    %v124 = vunpack.c.l.b16 %v88
    %v125 = vunpack.c.l.b16 %v89
    %v126 = vunpack.c.l.b16 %v90
    %v127 = vunpack.c.l.b16 %v91
    %v128 = vunpack.c.l.b16 %v92
    %v129 = vunpack.c.l.b16 %v93
    %v130 = vunpack.c.l.b16 %v94
    %v131 = vunpack.c.l.b16 %v95
    %v132 = vunpack.c.l.b16 %v96
    %v133 = vunpack.c.l.b16 %v97
    %v134 = vpack.c.b16 %v119, %v118
    %v135 = vpack.c.b16 %v121, %v120
    %v136 = vpack.c.b16 %v123, %v122
    %v137 = vpack.c.b16 %v125, %v124
    %v138 = vpack.c.b16 %v127, %v126
    %v139 = vpack.c.b16 %v129, %v128
    %v140 = vpack.c.b16 %v131, %v130
    %v141 = vpack.c.b16 %v133, %v132
    %150 = vmatpush.bf16.msra.mxu0 %v141
    %151 = vmatpush.bf16.msra.mxu0 %v140
    %152 = vmatpush.bf16.msra.mxu0 %v139
    %153 = vmatpush.bf16.msra.mxu0 %v138
    %154 = vmatpush.bf16.msra.mxu0 %v137
    %155 = vmatpush.bf16.msra.mxu0 %v136
    %156 = vmatpush.bf16.msra.mxu0 %v135
    %157 = vmatpush.bf16.msra.mxu0 %v134
    %158 = vmatmul.bf16.gmra.mxu0 %v81
    %v159 = vpop.f32.mrf.mxu0
    %v160 = vadd.f32 %v100, %v159
    %v161 = vpop.f32.mrf.mxu0
    %162 = vdwg.mxu0
    %v163 = vmax.f32 %v160, 0.0
    %v164 = vpack.c.bf16 %v163, %v163
    %v165 = vld [vmem:[#allocation2] sm:$0xf]
    %v166 = vld [vmem:[#allocation2 + $0x4] sm:$0xf]
    %v167 = vld [vmem:[#allocation2 + $0x8] sm:$0xf]
    %v168 = vld [vmem:[#allocation2 + $0xc] sm:$0xf]
    %v169 = vld [vmem:[#allocation2 + $0x10] sm:$0xf]
    %v170 = vld [vmem:[#allocation2 + $0x14] sm:$0xf]
    %v171 = vld [vmem:[#allocation2 + $0x18] sm:$0xf]
    %v172 = vld [vmem:[#allocation2 + $0x1c] sm:$0xf]
    %v173 = vld [vmem:[#allocation2 + $0x20] sm:$0xf]
    %v174 = vld [vmem:[#allocation2 + $0x24] sm:$0xf]
    %v175 = vld [vmem:[#allocation2 + $0x28] sm:$0xf]
    %v176 = vld [vmem:[#allocation2 + $0x2c] sm:$0xf]
    %v177 = vld [vmem:[#allocation2 + $0x30] sm:$0xf]
    %v178 = vld [vmem:[#allocation2 + $0x34] sm:$0xf]
    %v179 = vld [vmem:[#allocation2 + $0x38] sm:$0xf]
    %v180 = vld [vmem:[#allocation2 + $0x3c] sm:$0xf]
    %v181 = vld [vmem:[%s6] sm:$0x1]
    %v183 = vperm.slane %v181, 0
    %v201 = vunpack.c.l.b16 %v165
    %v202 = vunpack.c.l.b16 %v166
    %v203 = vunpack.c.l.b16 %v167
    %v204 = vunpack.c.l.b16 %v168
    %v205 = vunpack.c.l.b16 %v169
    %v206 = vunpack.c.l.b16 %v170
    %v207 = vunpack.c.l.b16 %v171
    %v208 = vunpack.c.l.b16 %v172
    %v209 = vunpack.c.l.b16 %v173
    %v210 = vunpack.c.l.b16 %v174
    %v211 = vunpack.c.l.b16 %v175
    %v212 = vunpack.c.l.b16 %v176
    %v213 = vunpack.c.l.b16 %v177
    %v214 = vunpack.c.l.b16 %v178
    %v215 = vunpack.c.l.b16 %v179
    %v216 = vunpack.c.l.b16 %v180
    %v217 = vpack.c.b16 %v202, %v201
    %v218 = vpack.c.b16 %v204, %v203
    %v219 = vpack.c.b16 %v206, %v205
    %v220 = vpack.c.b16 %v208, %v207
    %v221 = vpack.c.b16 %v210, %v209
    %v222 = vpack.c.b16 %v212, %v211
    %v223 = vpack.c.b16 %v214, %v213
    %v224 = vpack.c.b16 %v216, %v215
    %233 = vmatpush.bf16.msra.mxu0 %v224
    %234 = vmatpush.bf16.msra.mxu0 %v223
    %235 = vmatpush.bf16.msra.mxu0 %v222
    %236 = vmatpush.bf16.msra.mxu0 %v221
    %237 = vmatpush.bf16.msra.mxu0 %v220
    %238 = vmatpush.bf16.msra.mxu0 %v219
    %239 = vmatpush.bf16.msra.mxu0 %v218
    %240 = vmatpush.bf16.msra.mxu0 %v217
    %241 = vmatmul.bf16.gmra.mxu0 %v164
    %v242 = vpop.f32.mrf.mxu0
    %v243 = vadd.f32 %v183, %v242
    %v244 = vpop.f32.mrf.mxu0
    %245 = vdwg.mxu0
    %v246 = vmax.f32 %v243, 0.0
    %v247 = vpack.c.bf16 %v246, %v246
    %v248 = vld [vmem:[%s7] sm:$0xf]
    %v249 = vld [vmem:[%s7 + $0x4] sm:$0xf]
    %v250 = vld [vmem:[%s7 + $0x8] sm:$0xf]
    %v251 = vld [vmem:[%s7 + $0xc] sm:$0xf]
    %v252 = vld [vmem:[%s7 + $0x10] sm:$0xf]
    %v253 = vld [vmem:[%s7 + $0x14] sm:$0xf]
    %v254 = vld [vmem:[%s7 + $0x18] sm:$0xf]
    %v255 = vld [vmem:[%s7 + $0x1c] sm:$0xf]
    %v256 = vld [vmem:[%s7 + $0x20] sm:$0xf]
    %v257 = vld [vmem:[%s7 + $0x24] sm:$0xf]
    %v258 = vld [vmem:[%s7 + $0x28] sm:$0xf]
    %v259 = vld [vmem:[%s7 + $0x2c] sm:$0xf]
    %v260 = vld [vmem:[%s7 + $0x30] sm:$0xf]
    %v261 = vld [vmem:[%s7 + $0x34] sm:$0xf]
    %v262 = vld [vmem:[%s7 + $0x38] sm:$0xf]
    %v263 = vld [vmem:[%s7 + $0x3c] sm:$0xf]
    %v264 = vld [vmem:[%s8] sm:$0x1]
    %v266 = vperm.slane %v264, 0
    %v284 = vunpack.c.l.b16 %v248
    %v285 = vunpack.c.l.b16 %v249
    %v286 = vunpack.c.l.b16 %v250
    %v287 = vunpack.c.l.b16 %v251
    %v288 = vunpack.c.l.b16 %v252
    %v289 = vunpack.c.l.b16 %v253
    %v290 = vunpack.c.l.b16 %v254
    %v291 = vunpack.c.l.b16 %v255
    %v292 = vunpack.c.l.b16 %v256
    %v293 = vunpack.c.l.b16 %v257
    %v294 = vunpack.c.l.b16 %v258
    %v295 = vunpack.c.l.b16 %v259
    %v296 = vunpack.c.l.b16 %v260
    %v297 = vunpack.c.l.b16 %v261
    %v298 = vunpack.c.l.b16 %v262
    %v299 = vunpack.c.l.b16 %v263
    %v300 = vpack.c.b16 %v285, %v284
    %v301 = vpack.c.b16 %v287, %v286
    %v302 = vpack.c.b16 %v289, %v288
    %v303 = vpack.c.b16 %v291, %v290
    %v304 = vpack.c.b16 %v293, %v292
    %v305 = vpack.c.b16 %v295, %v294
    %v306 = vpack.c.b16 %v297, %v296
    %v307 = vpack.c.b16 %v299, %v298
    %316 = vmatpush.bf16.msra.mxu0 %v307
    %317 = vmatpush.bf16.msra.mxu0 %v306
    %318 = vmatpush.bf16.msra.mxu0 %v305
    %319 = vmatpush.bf16.msra.mxu0 %v304
    %320 = vmatpush.bf16.msra.mxu0 %v303
    %321 = vmatpush.bf16.msra.mxu0 %v302
    %322 = vmatpush.bf16.msra.mxu0 %v301
    %323 = vmatpush.bf16.msra.mxu0 %v300
    %324 = vmatmul.bf16.gmra.mxu0 %v247
    %v325 = vpop.f32.mrf.mxu0
    %v326 = vadd.f32 %v266, %v325
    %v327 = vpop.f32.mrf.mxu0
    %328 = vdwg.mxu0
    %329 = vst.msk [vmem:[%s9] sm:$0xff] %vm56, %v326
    // Predicated region
    $region42: #{tpu_custom_call.1} parent=1 // pred_check
      _
    $region43: #{tpu_custom_call.1} parent=1 // pred_check_branch
      %331 = sbr.rel (0) target = $region45
    $region44: #{tpu_custom_call.1} parent=1 // pred_region
      _
    $region45: #{tpu_custom_call.1} parent=1 // pred_fallthru
      _
    // Predicated region
    $region46: #{tpu_custom_call.1} parent=1 // pred_check
      _
    $region47: #{tpu_custom_call.1} parent=1 // pred_check_branch
      %333 = sbr.rel (0) target = $region49
    $region48: #{tpu_custom_call.1} parent=1 // pred_region
      _
    $region49: #{tpu_custom_call.1} parent=1 // pred_fallthru
      _
    %334 = vsyncpa [#allocation3], 1

</llo_original>
